<compile_context>
chip_gen: v6e
topology: v6e:2x2x1
jax: 0.10.0
libtpu: 0.0.40
codegen_flags: <defaults>
</compile_context>

<pallas_src>
import functools

import jax
import jax.numpy as jnp
from jax.experimental import pallas as pl
from jax.experimental.pallas import tpu as pltpu

LANES = 128     # vreg lane width; batch goes on lanes
SUBLANES = 8    # vreg sublane count; block row granularity
H = 6           # hidden width of the FC net

# Packed-parameter layout (flat f32 vector in SMEM):
OFF_W1 = 0      # (6,)   Linear(1,6) weight: w1[j]  = in 0 -> out j
OFF_B1 = 6      # (6,)
OFF_W2 = 12     # (36,)  Linear(6,6) weight row-major: w2[i*6+j] = in i -> out j
OFF_B2 = 48     # (6,)
OFF_W3N = 54    # (6,)   NEGATED Linear(6,1) weight: w3n[i] = -(in i -> out 0)
OFF_B3N = 60    # (1,)   NEGATED bias
PACKED_LEN = 64 # padded to a tidy SMEM size


def fc_kernel(p_ref, x_ref, o_ref, *, hidden_dtype):
    # x: (block_rows, 128) f32, batch lane-dense.
    x = x_ref[...].astype(hidden_dtype)

    # Hidden-layer weights are read as scalars from SMEM and cast to the
    # hidden compute dtype so bf16 compute stays bf16 (no silent f32 promote).
    def wh(off):
        return p_ref[off].astype(hidden_dtype)

    # Layer 1: Linear(1, 6) + ReLU -> 6 scalar-broadcast FMAs on the VPU
    # (a (B,1)@(1,6) MXU matmul would run the MXU at <1% utilization).
    h1 = [jnp.maximum(x * wh(OFF_W1 + j) + wh(OFF_B1 + j), 0.0)
          for j in range(H)]

    # Dropout(p=0.5): identity in eval/inference mode.

    # Layer 2: Linear(6, 6) + ReLU -> 36 scalar-broadcast FMAs (no MXU).
    h2 = []
    for j in range(H):
        acc = h1[0] * wh(OFF_W2 + j) + wh(OFF_B2 + j)
        for i in range(1, H):
            acc = acc + h1[i] * wh(OFF_W2 + i * H + j)
        h2.append(jnp.maximum(acc, 0.0))

    # Layer 3: Linear(6, 1) in f32 with PRE-NEGATED weights/bias, so we get
    # z_neg = -z directly (one fewer VALU op on the saturated slot).
    # bf16 * f32-scalar promotes to f32, so no explicit casts are needed.
    zneg = h2[0] * p_ref[OFF_W3N + 0] + p_ref[OFF_B3N]
    for i in range(1, H):
        zneg = zneg + h2[i] * p_ref[OFF_W3N + i]

    # Sigmoid: exp on the (otherwise idle) EUP, exact division (the
    # approximate reciprocal was too coarse and broke the accuracy check).
    o_ref[...] = 1.0 / (1.0 + jnp.exp(zneg))


def pack_params(params):
    """Concatenate all weights/biases into one flat f32 vector (SMEM-resident).
    Layer-3 weight and bias are stored negated (see fc_kernel)."""
    flat = jnp.concatenate([
        params["w1"].reshape(-1),    # (6,)   stored (in, out) = (1, 6)
        params["b1"].reshape(-1),    # (6,)
        params["w2"].reshape(-1),    # (36,)  stored (in, out) = (6, 6), row-major
        params["b2"].reshape(-1),    # (6,)
        (-params["w3"]).reshape(-1), # (6,)   negated, stored (in, out) = (6, 1)
        (-params["b3"]).reshape(-1), # (1,)   negated
    ]).astype(jnp.float32)
    return jnp.pad(flat, (0, PACKED_LEN - flat.shape[0]))


def fc_forward_lane_dense(x2, params, *, block_rows=512,
                          hidden_dtype=jnp.float32, core_parallel=False):
    """Lane-dense entry point: x2 is (rows, 128) f32 -> (rows, 128) f32.

    Use this when the caller can keep data in the lane-dense layout end-to-end
    (zero wrapper-side copies). rows does not need to be a multiple of
    block_rows: the last grid tile is ragged and Pallas clips it.
    """
    rows, lanes = x2.shape
    assert lanes == LANES

    # Clamp the tile for tiny batches; keep it a multiple of 8 sublanes for
    # the (8, 128) block-shape rule. Production default is large (512) so the
    # ~600-cycle per-step overhead and the SMEM scalar broadcasts amortize.
    block_rows = max(SUBLANES, min(block_rows, max(rows, SUBLANES)))
    block_rows = (block_rows // SUBLANES) * SUBLANES

    grid = (pl.cdiv(rows, block_rows),)

    # CORE_PARALLEL shards the batch axis across v7x's two TensorCores
    # (near-2x for this VALU-bound kernel); plain "parallel" is the safe
    # default on single-TC v5e/v6e.
    sem = pltpu.CORE_PARALLEL if core_parallel else "parallel"

    p = pack_params(params)
    kern = functools.partial(fc_kernel, hidden_dtype=hidden_dtype)

    return pl.pallas_call(
        kern,
        out_shape=jax.ShapeDtypeStruct((rows, LANES), jnp.float32),
        grid=grid,
        in_specs=[
            # Packed params: one small SMEM-resident vector, read as scalars.
            pl.BlockSpec(memory_space=pltpu.MemorySpace.SMEM),
            # x: (block_rows, 128) tiles, auto double-buffered over the grid.
            pl.BlockSpec((block_rows, LANES), lambda i: (i, 0)),
        ],
        out_specs=pl.BlockSpec((block_rows, LANES), lambda i: (i, 0)),
        compiler_params=pltpu.CompilerParams(dimension_semantics=(sem,)),
    )(p, x2)


def fc_forward(x, params, *, block_rows=512, hidden_dtype=jnp.float32,
               core_parallel=False):
    """x: (B, 1) float32 -> (B, 1) float32.

    The batch is padded only to 128-element (lane) granularity — never to
    block_rows*128 — and the (B,) <-> (rows, 128) reshapes are row-major
    bitcasts (free). A materializing pad/slice pair is emitted only when
    B % 128 != 0.
    """
    B = x.shape[0]

    xf = x.reshape(-1)                               # free (layout-preserving)
    Bp = pl.cdiv(B, LANES) * LANES                   # pad to lane granularity only
    if Bp != B:
        xf = jnp.pad(xf, (0, Bp - B))
    rows = Bp // LANES
    x2 = xf.reshape(rows, LANES)                     # free (row-major bitcast)

    out2 = fc_forward_lane_dense(
        x2, params, block_rows=block_rows,
        hidden_dtype=hidden_dtype, core_parallel=core_parallel)

    out = out2.reshape(-1)                           # free
    if Bp != B:
        out = out[:B]
    return out.reshape(B, 1)                         # free


def init_params(key):
    """nn.Linear-style U(-1/sqrt(fan_in), 1/sqrt(fan_in)) init.
    Weights stored pre-transposed as (in_features, out_features)."""
    def linear(key, fan_in, fan_out):
        kw, kb = jax.random.split(key)
        bound = 1.0 / (fan_in ** 0.5)
        w = jax.random.uniform(kw, (fan_in, fan_out), jnp.float32, -bound, bound)
        b = jax.random.uniform(kb, (1, fan_out), jnp.float32, -bound, bound)
        return w, b

    k1, k2, k3 = jax.random.split(key, 3)
    w1, b1 = linear(k1, 1, 6)
    w2, b2 = linear(k2, 6, 6)
    w3, b3 = linear(k3, 6, 1)
    return {"w1": w1, "b1": b1, "w2": w2, "b2": b2, "w3": w3, "b3": b3}


def fc_reference(x, p):
    """Pure-JAX reference (highest precision so it is a trustworthy oracle)."""
    h = jnp.maximum(jnp.dot(x, p["w1"], precision="highest") + p["b1"], 0.0)
    h = jnp.maximum(jnp.dot(h, p["w2"], precision="highest") + p["b2"], 0.0)
    z = jnp.dot(h, p["w3"], precision="highest") + p["b3"]
    return 1.0 / (1.0 + jnp.exp(-z))


if __name__ == "__main__":
    key = jax.random.PRNGKey(0)
    k_params, k_x = jax.random.split(key)

    params = init_params(k_params)
    B = 3000                                     # not a multiple of 128 -> tail path
    x = jax.random.normal(k_x, (B, 1), jnp.float32)
    ref = fc_reference(x, params)

    # 1) Production path: default large tile (clamped to rows=24 here), f32.
    out = fc_forward(x, params)
    jax.block_until_ready(out)
    assert out.shape == (B, 1)
    assert jnp.allclose(out, ref, atol=1e-4, rtol=1e-4), "f32 default-tile mismatch"

    # 2) Multi-step pipelined grid with a ragged last tile (rows=24, tile=16).
    out_small = fc_forward(x, params, block_rows=16)
    jax.block_until_ready(out_small)
    assert jnp.allclose(out_small, ref, atol=1e-4, rtol=1e-4), "ragged-grid mismatch"

    # 3) bf16 hidden-layer option (v6e/v7x VALU throughput); looser tolerance
    #    since bf16 has ~4e-3 relative error per op.
    out_bf16 = fc_forward(x, params, hidden_dtype=jnp.bfloat16)
    jax.block_until_ready(out_bf16)
    assert jnp.allclose(out_bf16, ref, atol=2e-2, rtol=2e-2), "bf16 hidden mismatch"

    print("KERNEL_OK")
</pallas_src>

<mosaic_0001>
module attributes {stable_mosaic.version = 11 : i64} {
  func.func @fc_kernel(%arg0: i32, %arg1: memref<64xf32, #tpu.memory_space<smem>>, %arg2: memref<24x128xf32, #tpu.memory_space<vmem>>, %arg3: memref<24x128xf32, #tpu.memory_space<vmem>>) attributes {dimension_semantics = [#tpu.dimension_semantics<parallel>], iteration_bounds = array<i64: 1>, scalar_prefetch = 0 : i64, scratch_operands = 0 : i64, tpu.core_type = #tpu.core_type<tc>, window_params = [{transform_indices = @transform_0, window_bounds = array<i64: 64>}, {transform_indices = @transform_1, window_bounds = array<i64: 24, 128>}, {transform_indices = @transform_2, window_bounds = array<i64: 24, 128>}]} {
    %c0 = arith.constant 0 : index
    %c0_0 = arith.constant 0 : index
    %0 = vector.load %arg2[%c0, %c0_0] : memref<24x128xf32, #tpu.memory_space<vmem>>, vector<24x128xf32>
    %c0_1 = arith.constant 0 : index
    %1 = memref.load %arg1[%c0_1] : memref<64xf32, #tpu.memory_space<smem>>
    %2 = vector.broadcast %1 : f32 to vector<24x128xf32>
    %3 = arith.mulf %0, %2 : vector<24x128xf32>
    %c6 = arith.constant 6 : index
    %4 = memref.load %arg1[%c6] : memref<64xf32, #tpu.memory_space<smem>>
    %5 = vector.broadcast %4 : f32 to vector<24x128xf32>
    %6 = arith.addf %3, %5 : vector<24x128xf32>
    %cst = arith.constant 0.000000e+00 : f32
    %7 = vector.broadcast %cst : f32 to vector<24x128xf32>
    %8 = arith.maximumf %6, %7 : vector<24x128xf32>
    %c1 = arith.constant 1 : index
    %9 = memref.load %arg1[%c1] : memref<64xf32, #tpu.memory_space<smem>>
    %10 = vector.broadcast %9 : f32 to vector<24x128xf32>
    %11 = arith.mulf %0, %10 : vector<24x128xf32>
    %c7 = arith.constant 7 : index
    %12 = memref.load %arg1[%c7] : memref<64xf32, #tpu.memory_space<smem>>
    %13 = vector.broadcast %12 : f32 to vector<24x128xf32>
    %14 = arith.addf %11, %13 : vector<24x128xf32>
    %cst_2 = arith.constant 0.000000e+00 : f32
    %15 = vector.broadcast %cst_2 : f32 to vector<24x128xf32>
    %16 = arith.maximumf %14, %15 : vector<24x128xf32>
    %c2 = arith.constant 2 : index
    %17 = memref.load %arg1[%c2] : memref<64xf32, #tpu.memory_space<smem>>
    %18 = vector.broadcast %17 : f32 to vector<24x128xf32>
    %19 = arith.mulf %0, %18 : vector<24x128xf32>
    %c8 = arith.constant 8 : index
    %20 = memref.load %arg1[%c8] : memref<64xf32, #tpu.memory_space<smem>>
    %21 = vector.broadcast %20 : f32 to vector<24x128xf32>
    %22 = arith.addf %19, %21 : vector<24x128xf32>
    %cst_3 = arith.constant 0.000000e+00 : f32
    %23 = vector.broadcast %cst_3 : f32 to vector<24x128xf32>
    %24 = arith.maximumf %22, %23 : vector<24x128xf32>
    %c3 = arith.constant 3 : index
    %25 = memref.load %arg1[%c3] : memref<64xf32, #tpu.memory_space<smem>>
    %26 = vector.broadcast %25 : f32 to vector<24x128xf32>
    %27 = arith.mulf %0, %26 : vector<24x128xf32>
    %c9 = arith.constant 9 : index
    %28 = memref.load %arg1[%c9] : memref<64xf32, #tpu.memory_space<smem>>
    %29 = vector.broadcast %28 : f32 to vector<24x128xf32>
    %30 = arith.addf %27, %29 : vector<24x128xf32>
    %cst_4 = arith.constant 0.000000e+00 : f32
    %31 = vector.broadcast %cst_4 : f32 to vector<24x128xf32>
    %32 = arith.maximumf %30, %31 : vector<24x128xf32>
    %c4 = arith.constant 4 : index
    %33 = memref.load %arg1[%c4] : memref<64xf32, #tpu.memory_space<smem>>
    %34 = vector.broadcast %33 : f32 to vector<24x128xf32>
    %35 = arith.mulf %0, %34 : vector<24x128xf32>
    %c10 = arith.constant 10 : index
    %36 = memref.load %arg1[%c10] : memref<64xf32, #tpu.memory_space<smem>>
    %37 = vector.broadcast %36 : f32 to vector<24x128xf32>
    %38 = arith.addf %35, %37 : vector<24x128xf32>
    %cst_5 = arith.constant 0.000000e+00 : f32
    %39 = vector.broadcast %cst_5 : f32 to vector<24x128xf32>
    %40 = arith.maximumf %38, %39 : vector<24x128xf32>
    %c5 = arith.constant 5 : index
    %41 = memref.load %arg1[%c5] : memref<64xf32, #tpu.memory_space<smem>>
    %42 = vector.broadcast %41 : f32 to vector<24x128xf32>
    %43 = arith.mulf %0, %42 : vector<24x128xf32>
    %c11 = arith.constant 11 : index
    %44 = memref.load %arg1[%c11] : memref<64xf32, #tpu.memory_space<smem>>
    %45 = vector.broadcast %44 : f32 to vector<24x128xf32>
    %46 = arith.addf %43, %45 : vector<24x128xf32>
    %cst_6 = arith.constant 0.000000e+00 : f32
    %47 = vector.broadcast %cst_6 : f32 to vector<24x128xf32>
    %48 = arith.maximumf %46, %47 : vector<24x128xf32>
    %c12 = arith.constant 12 : index
    %49 = memref.load %arg1[%c12] : memref<64xf32, #tpu.memory_space<smem>>
    %50 = vector.broadcast %49 : f32 to vector<24x128xf32>
    %51 = arith.mulf %8, %50 : vector<24x128xf32>
    %c48 = arith.constant 48 : index
    %52 = memref.load %arg1[%c48] : memref<64xf32, #tpu.memory_space<smem>>
    %53 = vector.broadcast %52 : f32 to vector<24x128xf32>
    %54 = arith.addf %51, %53 : vector<24x128xf32>
    %c18 = arith.constant 18 : index
    %55 = memref.load %arg1[%c18] : memref<64xf32, #tpu.memory_space<smem>>
    %56 = vector.broadcast %55 : f32 to vector<24x128xf32>
    %57 = arith.mulf %16, %56 : vector<24x128xf32>
    %58 = arith.addf %54, %57 : vector<24x128xf32>
    %c24 = arith.constant 24 : index
    %59 = memref.load %arg1[%c24] : memref<64xf32, #tpu.memory_space<smem>>
    %60 = vector.broadcast %59 : f32 to vector<24x128xf32>
    %61 = arith.mulf %24, %60 : vector<24x128xf32>
    %62 = arith.addf %58, %61 : vector<24x128xf32>
    %c30 = arith.constant 30 : index
    %63 = memref.load %arg1[%c30] : memref<64xf32, #tpu.memory_space<smem>>
    %64 = vector.broadcast %63 : f32 to vector<24x128xf32>
    %65 = arith.mulf %32, %64 : vector<24x128xf32>
    %66 = arith.addf %62, %65 : vector<24x128xf32>
    %c36 = arith.constant 36 : index
    %67 = memref.load %arg1[%c36] : memref<64xf32, #tpu.memory_space<smem>>
    %68 = vector.broadcast %67 : f32 to vector<24x128xf32>
    %69 = arith.mulf %40, %68 : vector<24x128xf32>
    %70 = arith.addf %66, %69 : vector<24x128xf32>
    %c42 = arith.constant 42 : index
    %71 = memref.load %arg1[%c42] : memref<64xf32, #tpu.memory_space<smem>>
    %72 = vector.broadcast %71 : f32 to vector<24x128xf32>
    %73 = arith.mulf %48, %72 : vector<24x128xf32>
    %74 = arith.addf %70, %73 : vector<24x128xf32>
    %cst_7 = arith.constant 0.000000e+00 : f32
    %75 = vector.broadcast %cst_7 : f32 to vector<24x128xf32>
    %76 = arith.maximumf %74, %75 : vector<24x128xf32>
    %c13 = arith.constant 13 : index
    %77 = memref.load %arg1[%c13] : memref<64xf32, #tpu.memory_space<smem>>
    %78 = vector.broadcast %77 : f32 to vector<24x128xf32>
    %79 = arith.mulf %8, %78 : vector<24x128xf32>
    %c49 = arith.constant 49 : index
    %80 = memref.load %arg1[%c49] : memref<64xf32, #tpu.memory_space<smem>>
    %81 = vector.broadcast %80 : f32 to vector<24x128xf32>
    %82 = arith.addf %79, %81 : vector<24x128xf32>
    %c19 = arith.constant 19 : index
    %83 = memref.load %arg1[%c19] : memref<64xf32, #tpu.memory_space<smem>>
    %84 = vector.broadcast %83 : f32 to vector<24x128xf32>
    %85 = arith.mulf %16, %84 : vector<24x128xf32>
    %86 = arith.addf %82, %85 : vector<24x128xf32>
    %c25 = arith.constant 25 : index
    %87 = memref.load %arg1[%c25] : memref<64xf32, #tpu.memory_space<smem>>
    %88 = vector.broadcast %87 : f32 to vector<24x128xf32>
    %89 = arith.mulf %24, %88 : vector<24x128xf32>
    %90 = arith.addf %86, %89 : vector<24x128xf32>
    %c31 = arith.constant 31 : index
    %91 = memref.load %arg1[%c31] : memref<64xf32, #tpu.memory_space<smem>>
    %92 = vector.broadcast %91 : f32 to vector<24x128xf32>
    %93 = arith.mulf %32, %92 : vector<24x128xf32>
    %94 = arith.addf %90, %93 : vector<24x128xf32>
    %c37 = arith.constant 37 : index
    %95 = memref.load %arg1[%c37] : memref<64xf32, #tpu.memory_space<smem>>
    %96 = vector.broadcast %95 : f32 to vector<24x128xf32>
    %97 = arith.mulf %40, %96 : vector<24x128xf32>
    %98 = arith.addf %94, %97 : vector<24x128xf32>
    %c43 = arith.constant 43 : index
    %99 = memref.load %arg1[%c43] : memref<64xf32, #tpu.memory_space<smem>>
    %100 = vector.broadcast %99 : f32 to vector<24x128xf32>
    %101 = arith.mulf %48, %100 : vector<24x128xf32>
    %102 = arith.addf %98, %101 : vector<24x128xf32>
    %cst_8 = arith.constant 0.000000e+00 : f32
    %103 = vector.broadcast %cst_8 : f32 to vector<24x128xf32>
    %104 = arith.maximumf %102, %103 : vector<24x128xf32>
    %c14 = arith.constant 14 : index
    %105 = memref.load %arg1[%c14] : memref<64xf32, #tpu.memory_space<smem>>
    %106 = vector.broadcast %105 : f32 to vector<24x128xf32>
    %107 = arith.mulf %8, %106 : vector<24x128xf32>
    %c50 = arith.constant 50 : index
    %108 = memref.load %arg1[%c50] : memref<64xf32, #tpu.memory_space<smem>>
    %109 = vector.broadcast %108 : f32 to vector<24x128xf32>
    %110 = arith.addf %107, %109 : vector<24x128xf32>
    %c20 = arith.constant 20 : index
    %111 = memref.load %arg1[%c20] : memref<64xf32, #tpu.memory_space<smem>>
    %112 = vector.broadcast %111 : f32 to vector<24x128xf32>
    %113 = arith.mulf %16, %112 : vector<24x128xf32>
    %114 = arith.addf %110, %113 : vector<24x128xf32>
    %c26 = arith.constant 26 : index
    %115 = memref.load %arg1[%c26] : memref<64xf32, #tpu.memory_space<smem>>
    %116 = vector.broadcast %115 : f32 to vector<24x128xf32>
    %117 = arith.mulf %24, %116 : vector<24x128xf32>
    %118 = arith.addf %114, %117 : vector<24x128xf32>
    %c32 = arith.constant 32 : index
    %119 = memref.load %arg1[%c32] : memref<64xf32, #tpu.memory_space<smem>>
    %120 = vector.broadcast %119 : f32 to vector<24x128xf32>
    %121 = arith.mulf %32, %120 : vector<24x128xf32>
    %122 = arith.addf %118, %121 : vector<24x128xf32>
    %c38 = arith.constant 38 : index
    %123 = memref.load %arg1[%c38] : memref<64xf32, #tpu.memory_space<smem>>
    %124 = vector.broadcast %123 : f32 to vector<24x128xf32>
    %125 = arith.mulf %40, %124 : vector<24x128xf32>
    %126 = arith.addf %122, %125 : vector<24x128xf32>
    %c44 = arith.constant 44 : index
    %127 = memref.load %arg1[%c44] : memref<64xf32, #tpu.memory_space<smem>>
    %128 = vector.broadcast %127 : f32 to vector<24x128xf32>
    %129 = arith.mulf %48, %128 : vector<24x128xf32>
    %130 = arith.addf %126, %129 : vector<24x128xf32>
    %cst_9 = arith.constant 0.000000e+00 : f32
    %131 = vector.broadcast %cst_9 : f32 to vector<24x128xf32>
    %132 = arith.maximumf %130, %131 : vector<24x128xf32>
    %c15 = arith.constant 15 : index
    %133 = memref.load %arg1[%c15] : memref<64xf32, #tpu.memory_space<smem>>
    %134 = vector.broadcast %133 : f32 to vector<24x128xf32>
    %135 = arith.mulf %8, %134 : vector<24x128xf32>
    %c51 = arith.constant 51 : index
    %136 = memref.load %arg1[%c51] : memref<64xf32, #tpu.memory_space<smem>>
    %137 = vector.broadcast %136 : f32 to vector<24x128xf32>
    %138 = arith.addf %135, %137 : vector<24x128xf32>
    %c21 = arith.constant 21 : index
    %139 = memref.load %arg1[%c21] : memref<64xf32, #tpu.memory_space<smem>>
    %140 = vector.broadcast %139 : f32 to vector<24x128xf32>
    %141 = arith.mulf %16, %140 : vector<24x128xf32>
    %142 = arith.addf %138, %141 : vector<24x128xf32>
    %c27 = arith.constant 27 : index
    %143 = memref.load %arg1[%c27] : memref<64xf32, #tpu.memory_space<smem>>
    %144 = vector.broadcast %143 : f32 to vector<24x128xf32>
    %145 = arith.mulf %24, %144 : vector<24x128xf32>
    %146 = arith.addf %142, %145 : vector<24x128xf32>
    %c33 = arith.constant 33 : index
    %147 = memref.load %arg1[%c33] : memref<64xf32, #tpu.memory_space<smem>>
    %148 = vector.broadcast %147 : f32 to vector<24x128xf32>
    %149 = arith.mulf %32, %148 : vector<24x128xf32>
    %150 = arith.addf %146, %149 : vector<24x128xf32>
    %c39 = arith.constant 39 : index
    %151 = memref.load %arg1[%c39] : memref<64xf32, #tpu.memory_space<smem>>
    %152 = vector.broadcast %151 : f32 to vector<24x128xf32>
    %153 = arith.mulf %40, %152 : vector<24x128xf32>
    %154 = arith.addf %150, %153 : vector<24x128xf32>
    %c45 = arith.constant 45 : index
    %155 = memref.load %arg1[%c45] : memref<64xf32, #tpu.memory_space<smem>>
    %156 = vector.broadcast %155 : f32 to vector<24x128xf32>
    %157 = arith.mulf %48, %156 : vector<24x128xf32>
    %158 = arith.addf %154, %157 : vector<24x128xf32>
    %cst_10 = arith.constant 0.000000e+00 : f32
    %159 = vector.broadcast %cst_10 : f32 to vector<24x128xf32>
    %160 = arith.maximumf %158, %159 : vector<24x128xf32>
    %c16 = arith.constant 16 : index
    %161 = memref.load %arg1[%c16] : memref<64xf32, #tpu.memory_space<smem>>
    %162 = vector.broadcast %161 : f32 to vector<24x128xf32>
    %163 = arith.mulf %8, %162 : vector<24x128xf32>
    %c52 = arith.constant 52 : index
    %164 = memref.load %arg1[%c52] : memref<64xf32, #tpu.memory_space<smem>>
    %165 = vector.broadcast %164 : f32 to vector<24x128xf32>
    %166 = arith.addf %163, %165 : vector<24x128xf32>
    %c22 = arith.constant 22 : index
    %167 = memref.load %arg1[%c22] : memref<64xf32, #tpu.memory_space<smem>>
    %168 = vector.broadcast %167 : f32 to vector<24x128xf32>
    %169 = arith.mulf %16, %168 : vector<24x128xf32>
    %170 = arith.addf %166, %169 : vector<24x128xf32>
    %c28 = arith.constant 28 : index
    %171 = memref.load %arg1[%c28] : memref<64xf32, #tpu.memory_space<smem>>
    %172 = vector.broadcast %171 : f32 to vector<24x128xf32>
    %173 = arith.mulf %24, %172 : vector<24x128xf32>
    %174 = arith.addf %170, %173 : vector<24x128xf32>
    %c34 = arith.constant 34 : index
    %175 = memref.load %arg1[%c34] : memref<64xf32, #tpu.memory_space<smem>>
    %176 = vector.broadcast %175 : f32 to vector<24x128xf32>
    %177 = arith.mulf %32, %176 : vector<24x128xf32>
    %178 = arith.addf %174, %177 : vector<24x128xf32>
    %c40 = arith.constant 40 : index
    %179 = memref.load %arg1[%c40] : memref<64xf32, #tpu.memory_space<smem>>
    %180 = vector.broadcast %179 : f32 to vector<24x128xf32>
    %181 = arith.mulf %40, %180 : vector<24x128xf32>
    %182 = arith.addf %178, %181 : vector<24x128xf32>
    %c46 = arith.constant 46 : index
    %183 = memref.load %arg1[%c46] : memref<64xf32, #tpu.memory_space<smem>>
    %184 = vector.broadcast %183 : f32 to vector<24x128xf32>
    %185 = arith.mulf %48, %184 : vector<24x128xf32>
    %186 = arith.addf %182, %185 : vector<24x128xf32>
    %cst_11 = arith.constant 0.000000e+00 : f32
    %187 = vector.broadcast %cst_11 : f32 to vector<24x128xf32>
    %188 = arith.maximumf %186, %187 : vector<24x128xf32>
    %c17 = arith.constant 17 : index
    %189 = memref.load %arg1[%c17] : memref<64xf32, #tpu.memory_space<smem>>
    %190 = vector.broadcast %189 : f32 to vector<24x128xf32>
    %191 = arith.mulf %8, %190 : vector<24x128xf32>
    %c53 = arith.constant 53 : index
    %192 = memref.load %arg1[%c53] : memref<64xf32, #tpu.memory_space<smem>>
    %193 = vector.broadcast %192 : f32 to vector<24x128xf32>
    %194 = arith.addf %191, %193 : vector<24x128xf32>
    %c23 = arith.constant 23 : index
    %195 = memref.load %arg1[%c23] : memref<64xf32, #tpu.memory_space<smem>>
    %196 = vector.broadcast %195 : f32 to vector<24x128xf32>
    %197 = arith.mulf %16, %196 : vector<24x128xf32>
    %198 = arith.addf %194, %197 : vector<24x128xf32>
    %c29 = arith.constant 29 : index
    %199 = memref.load %arg1[%c29] : memref<64xf32, #tpu.memory_space<smem>>
    %200 = vector.broadcast %199 : f32 to vector<24x128xf32>
    %201 = arith.mulf %24, %200 : vector<24x128xf32>
    %202 = arith.addf %198, %201 : vector<24x128xf32>
    %c35 = arith.constant 35 : index
    %203 = memref.load %arg1[%c35] : memref<64xf32, #tpu.memory_space<smem>>
    %204 = vector.broadcast %203 : f32 to vector<24x128xf32>
    %205 = arith.mulf %32, %204 : vector<24x128xf32>
    %206 = arith.addf %202, %205 : vector<24x128xf32>
    %c41 = arith.constant 41 : index
    %207 = memref.load %arg1[%c41] : memref<64xf32, #tpu.memory_space<smem>>
    %208 = vector.broadcast %207 : f32 to vector<24x128xf32>
    %209 = arith.mulf %40, %208 : vector<24x128xf32>
    %210 = arith.addf %206, %209 : vector<24x128xf32>
    %c47 = arith.constant 47 : index
    %211 = memref.load %arg1[%c47] : memref<64xf32, #tpu.memory_space<smem>>
    %212 = vector.broadcast %211 : f32 to vector<24x128xf32>
    %213 = arith.mulf %48, %212 : vector<24x128xf32>
    %214 = arith.addf %210, %213 : vector<24x128xf32>
    %cst_12 = arith.constant 0.000000e+00 : f32
    %215 = vector.broadcast %cst_12 : f32 to vector<24x128xf32>
    %216 = arith.maximumf %214, %215 : vector<24x128xf32>
    %c54 = arith.constant 54 : index
    %217 = memref.load %arg1[%c54] : memref<64xf32, #tpu.memory_space<smem>>
    %218 = vector.broadcast %217 : f32 to vector<24x128xf32>
    %219 = arith.mulf %76, %218 : vector<24x128xf32>
    %c60 = arith.constant 60 : index
    %220 = memref.load %arg1[%c60] : memref<64xf32, #tpu.memory_space<smem>>
    %221 = vector.broadcast %220 : f32 to vector<24x128xf32>
    %222 = arith.addf %219, %221 : vector<24x128xf32>
    %c55 = arith.constant 55 : index
    %223 = memref.load %arg1[%c55] : memref<64xf32, #tpu.memory_space<smem>>
    %224 = vector.broadcast %223 : f32 to vector<24x128xf32>
    %225 = arith.mulf %104, %224 : vector<24x128xf32>
    %226 = arith.addf %222, %225 : vector<24x128xf32>
    %c56 = arith.constant 56 : index
    %227 = memref.load %arg1[%c56] : memref<64xf32, #tpu.memory_space<smem>>
    %228 = vector.broadcast %227 : f32 to vector<24x128xf32>
    %229 = arith.mulf %132, %228 : vector<24x128xf32>
    %230 = arith.addf %226, %229 : vector<24x128xf32>
    %c57 = arith.constant 57 : index
    %231 = memref.load %arg1[%c57] : memref<64xf32, #tpu.memory_space<smem>>
    %232 = vector.broadcast %231 : f32 to vector<24x128xf32>
    %233 = arith.mulf %160, %232 : vector<24x128xf32>
    %234 = arith.addf %230, %233 : vector<24x128xf32>
    %c58 = arith.constant 58 : index
    %235 = memref.load %arg1[%c58] : memref<64xf32, #tpu.memory_space<smem>>
    %236 = vector.broadcast %235 : f32 to vector<24x128xf32>
    %237 = arith.mulf %188, %236 : vector<24x128xf32>
    %238 = arith.addf %234, %237 : vector<24x128xf32>
    %c59 = arith.constant 59 : index
    %239 = memref.load %arg1[%c59] : memref<64xf32, #tpu.memory_space<smem>>
    %240 = vector.broadcast %239 : f32 to vector<24x128xf32>
    %241 = arith.mulf %216, %240 : vector<24x128xf32>
    %242 = arith.addf %238, %241 : vector<24x128xf32>
    %243 = math.exp %242 : vector<24x128xf32>
    %cst_13 = arith.constant 1.000000e+00 : f32
    %244 = vector.broadcast %cst_13 : f32 to vector<24x128xf32>
    %245 = arith.addf %244, %243 : vector<24x128xf32>
    %cst_14 = arith.constant 1.000000e+00 : f32
    %246 = vector.broadcast %cst_14 : f32 to vector<24x128xf32>
    %247 = arith.divf %246, %245 : vector<24x128xf32>
    %c0_15 = arith.constant 0 : index
    %c0_16 = arith.constant 0 : index
    %248 = vector.load %arg3[%c0_15, %c0_16] : memref<24x128xf32, #tpu.memory_space<vmem>>, vector<24x128xf32>
    tpu.vector_store %arg3[%c0_15, %c0_16], %247 {strides = array<i32>} : memref<24x128xf32, #tpu.memory_space<vmem>>, vector<24x128xf32>,
    return
  }
  func.func @transform_0(%arg0: i32) -> i32 {
    %c0_i32 = arith.constant 0 : i32
    %c0_i32_0 = arith.constant 0 : i32
    return %c0_i32 : i32
  }
  func.func @transform_1(%arg0: i32) -> (i32, i32) {
    %c0_i32 = arith.constant 0 : i32
    %c0_i32_0 = arith.constant 0 : i32
    return %arg0, %c0_i32 : i32, i32
  }
  func.func @transform_2(%arg0: i32) -> (i32, i32) {
    %c0_i32 = arith.constant 0 : i32
    %c0_i32_0 = arith.constant 0 : i32
    return %arg0, %c0_i32 : i32, i32
  }
}

</mosaic_0001>

<llo_original>
// kernel: tpu_custom_call.1
$region0: #{tpu_custom_call.1}
  #allocation0 [shape = 'u32[]', space=smem, size = 0x4, offset = 0x4, fixed_abs, tag = 'smem constant byte address 0x4 - core index']
  #allocation1 [shape = 'u32[144,128]{1,0:T(1,128)}', space=vmem, size = 0x12000, scoped, tag = 'internal scratch']
  %s0 = inlined_call_operand.hbm [shape: f32[64], index: 0, kind: input, shape index: {}]
  %s1 = inlined_call_operand.hbm [shape: f32[24,128], index: 1, kind: input, shape index: {}]
  %s2 = inlined_call_operand.hbm [shape: f32[24,128], index: 2, kind: output, shape index: {}]
  %s3 = sld [smem:[#allocation0]]
  $region26: #{tpu_custom_call.1} parent=0
    _
  %s5 = ssub.s32 1, %s3
  %s6 = scalar_select 0, %s5, %s3
  $region1: #{tpu_custom_call.1} parent=0
    #allocation2 [shape = 'u8[512]{0}', space=smem, size = 0x200, scoped, tag = 'input window, operand 0, single buffered']
    #allocation3 [shape = 's32[1]{0}', space=sflag, size = 0x4, scoped, tag = 'scoped memory for tpu_custom_call.1']
    #allocation4 [shape = 's32[1]{0}', space=sflag, size = 0x4, scoped, tag = 'scoped memory for tpu_custom_call.1']
    #allocation5 [shape = 's32[1]{0}', space=sflag, size = 0x4, scoped, tag = 'scoped memory for tpu_custom_call.1']
    #allocation6 [shape = 'u8[12288]{0}', space=vmem, size = 0x3000, scoped, tag = 'input window, operand 1, single buffered']
    #allocation7 [shape = 'u8[12288]{0}', space=vmem, size = 0x3000, scoped, tag = 'output window, operand 0, single buffered']
    %7 = vsyncpa [#allocation5], 0
    %8 = vsyncpa [#allocation3], 0
    %9 = vsyncpa [#allocation4], 0
    // Predicated region
    $region2: #{tpu_custom_call.1} parent=1 // pred_check
      _
    $region3: #{tpu_custom_call.1} parent=1 // pred_check_branch
      %11 = sbr.rel (0) target = $region5
    $region4: #{tpu_custom_call.1} parent=1 // pred_region
      %s13 = ssub.s32 16, 16
      %14 = vsyncadd [#allocation5], %s13
      %17 = dma.hbm_to_smem %s0, 16, [#allocation2], [#allocation5]
    $region5: #{tpu_custom_call.1} parent=1 // pred_fallthru
      _
    // Predicated region
    $region6: #{tpu_custom_call.1} parent=1 // pred_check
      _
    $region7: #{tpu_custom_call.1} parent=1 // pred_check_branch
      %19 = sbr.rel (0) target = $region9
    $region8: #{tpu_custom_call.1} parent=1 // pred_region
      %s21 = ssub.s32 384, 384
      %22 = vsyncadd [#allocation3], %s21
      %s23 = sshll.u32 [#allocation6], 4
      %s24 = int_to_ptr.vmem [resolvable:$true] %s23
      %29 = dma.hbm_to_vmem [thread:$0]  %s1, 384, %s24, [#allocation3], 128, 128, 8
    $region9: #{tpu_custom_call.1} parent=1 // pred_fallthru
      _
    // Predicated region
    $region10: #{tpu_custom_call.1} parent=1 // pred_check
      _
    $region11: #{tpu_custom_call.1} parent=1 // pred_check_branch
      %31 = sbr.rel (0) target = $region13
    $region12: #{tpu_custom_call.1} parent=1 // pred_region
      %32 = dma.done [#allocation5], 16
    $region13: #{tpu_custom_call.1} parent=1 // pred_fallthru
      _
    // Predicated region
    $region14: #{tpu_custom_call.1} parent=1 // pred_check
      _
    $region15: #{tpu_custom_call.1} parent=1 // pred_check_branch
      %34 = sbr.rel (0) target = $region17
    $region16: #{tpu_custom_call.1} parent=1 // pred_region
      %35 = dma.done [#allocation3], 384
    $region17: #{tpu_custom_call.1} parent=1 // pred_fallthru
      _
    %36 = sfence
    %v37 = vld [vmem:[#allocation6] sm:$0xff]
    %v38 = vld [vmem:[#allocation6 + $0x8] sm:$0xff]
    %v39 = vld [vmem:[#allocation6 + $0x10] sm:$0xff]
    %s40 = sld [smem:[#allocation2]]
    %v41 = vstv %s40
    %v42 = vmul.f32 %v37, %v41
    %v43 = vmul.f32 %v38, %v41
    %v44 = vmul.f32 %v39, %v41
    %s45 = sld [smem:[#allocation2 + $0x6]]
    %v46 = vstv %s45
    %v47 = vadd.f32 %v42, %v46
    %v48 = vadd.f32 %v43, %v46
    %v49 = vadd.f32 %v44, %v46
    %v50 = vmax.f32 %v47, 0.0
    %v51 = vmax.f32 %v48, 0.0
    %v52 = vmax.f32 %v49, 0.0
    %s53 = sld [smem:[#allocation2 + $0x1]]
    %v54 = vstv %s53
    %v55 = vmul.f32 %v37, %v54
    %v56 = vmul.f32 %v38, %v54
    %v57 = vmul.f32 %v39, %v54
    %s58 = sld [smem:[#allocation2 + $0x7]]
    %v59 = vstv %s58
    %v60 = vadd.f32 %v55, %v59
    %v61 = vadd.f32 %v56, %v59
    %v62 = vadd.f32 %v57, %v59
    %v63 = vmax.f32 %v60, 0.0
    %v64 = vmax.f32 %v61, 0.0
    %v65 = vmax.f32 %v62, 0.0
    %s66 = sld [smem:[#allocation2 + $0x2]]
    %v67 = vstv %s66
    %v68 = vmul.f32 %v37, %v67
    %v69 = vmul.f32 %v38, %v67
    %v70 = vmul.f32 %v39, %v67
    %s71 = sld [smem:[#allocation2 + $0x8]]
    %v72 = vstv %s71
    %v73 = vadd.f32 %v68, %v72
    %v74 = vadd.f32 %v69, %v72
    %v75 = vadd.f32 %v70, %v72
    %v76 = vmax.f32 %v73, 0.0
    %v77 = vmax.f32 %v74, 0.0
    %v78 = vmax.f32 %v75, 0.0
    %s79 = sld [smem:[#allocation2 + $0x3]]
    %v80 = vstv %s79
    %v81 = vmul.f32 %v37, %v80
    %v82 = vmul.f32 %v38, %v80
    %v83 = vmul.f32 %v39, %v80
    %s84 = sld [smem:[#allocation2 + $0x9]]
    %v85 = vstv %s84
    %v86 = vadd.f32 %v81, %v85
    %v87 = vadd.f32 %v82, %v85
    %v88 = vadd.f32 %v83, %v85
    %v89 = vmax.f32 %v86, 0.0
    %v90 = vmax.f32 %v87, 0.0
    %v91 = vmax.f32 %v88, 0.0
    %s92 = sld [smem:[#allocation2 + $0x4]]
    %v93 = vstv %s92
    %v94 = vmul.f32 %v37, %v93
    %v95 = vmul.f32 %v38, %v93
    %v96 = vmul.f32 %v39, %v93
    %s97 = sld [smem:[#allocation2 + $0xa]]
    %v98 = vstv %s97
    %v99 = vadd.f32 %v94, %v98
    %v100 = vadd.f32 %v95, %v98
    %v101 = vadd.f32 %v96, %v98
    %v102 = vmax.f32 %v99, 0.0
    %v103 = vmax.f32 %v100, 0.0
    %v104 = vmax.f32 %v101, 0.0
    %s105 = sld [smem:[#allocation2 + $0x5]]
    %v106 = vstv %s105
    %v107 = vmul.f32 %v37, %v106
    %v108 = vmul.f32 %v38, %v106
    %v109 = vmul.f32 %v39, %v106
    %s110 = sld [smem:[#allocation2 + $0xb]]
    %v111 = vstv %s110
    %v112 = vadd.f32 %v107, %v111
    %v113 = vadd.f32 %v108, %v111
    %v114 = vadd.f32 %v109, %v111
    %v115 = vmax.f32 %v112, 0.0
    %v116 = vmax.f32 %v113, 0.0
    %v117 = vmax.f32 %v114, 0.0
    %s118 = sld [smem:[#allocation2 + $0xc]]
    %v119 = vstv %s118
    %v120 = vmul.f32 %v50, %v119
    %v121 = vmul.f32 %v51, %v119
    %v122 = vmul.f32 %v52, %v119
    %s123 = sld [smem:[#allocation2 + $0x30]]
    %v124 = vstv %s123
    %v125 = vadd.f32 %v120, %v124
    %v126 = vadd.f32 %v121, %v124
    %v127 = vadd.f32 %v122, %v124
    %s128 = sld [smem:[#allocation2 + $0x12]]
    %v129 = vstv %s128
    %v130 = vmul.f32 %v63, %v129
    %v131 = vmul.f32 %v64, %v129
    %v132 = vmul.f32 %v65, %v129
    %v133 = vadd.f32 %v125, %v130
    %v134 = vadd.f32 %v126, %v131
    %v135 = vadd.f32 %v127, %v132
    %s136 = sld [smem:[#allocation2 + $0x18]]
    %v137 = vstv %s136
    %v138 = vmul.f32 %v76, %v137
    %v139 = vmul.f32 %v77, %v137
    %v140 = vmul.f32 %v78, %v137
    %v141 = vadd.f32 %v133, %v138
    %v142 = vadd.f32 %v134, %v139
    %v143 = vadd.f32 %v135, %v140
    %s144 = sld [smem:[#allocation2 + $0x1e]]
    %v145 = vstv %s144
    %v146 = vmul.f32 %v89, %v145
    %v147 = vmul.f32 %v90, %v145
    %v148 = vmul.f32 %v91, %v145
    %v149 = vadd.f32 %v141, %v146
    %v150 = vadd.f32 %v142, %v147
    %v151 = vadd.f32 %v143, %v148
    %s152 = sld [smem:[#allocation2 + $0x24]]
    %v153 = vstv %s152
    %v154 = vmul.f32 %v102, %v153
    %v155 = vmul.f32 %v103, %v153
    %v156 = vmul.f32 %v104, %v153
    %v157 = vadd.f32 %v149, %v154
    %v158 = vadd.f32 %v150, %v155
    %v159 = vadd.f32 %v151, %v156
    %s160 = sld [smem:[#allocation2 + $0x2a]]
    %v161 = vstv %s160
    %v162 = vmul.f32 %v115, %v161
    %v163 = vmul.f32 %v116, %v161
    %v164 = vmul.f32 %v117, %v161
    %v165 = vadd.f32 %v157, %v162
    %v166 = vadd.f32 %v158, %v163
    %v167 = vadd.f32 %v159, %v164
    %v168 = vmax.f32 %v165, 0.0
    %v169 = vmax.f32 %v166, 0.0
    %v170 = vmax.f32 %v167, 0.0
    %s171 = sld [smem:[#allocation2 + $0xd]]
    %v172 = vstv %s171
    %v173 = vmul.f32 %v50, %v172
    %v174 = vmul.f32 %v51, %v172
    %v175 = vmul.f32 %v52, %v172
    %s176 = sld [smem:[#allocation2 + $0x31]]
    %v177 = vstv %s176
    %v178 = vadd.f32 %v173, %v177
    %v179 = vadd.f32 %v174, %v177
    %v180 = vadd.f32 %v175, %v177
    %s181 = sld [smem:[#allocation2 + $0x13]]
    %v182 = vstv %s181
    %v183 = vmul.f32 %v63, %v182
    %v184 = vmul.f32 %v64, %v182
    %v185 = vmul.f32 %v65, %v182
    %v186 = vadd.f32 %v178, %v183
    %v187 = vadd.f32 %v179, %v184
    %v188 = vadd.f32 %v180, %v185
    %s189 = sld [smem:[#allocation2 + $0x19]]
    %v190 = vstv %s189
    %v191 = vmul.f32 %v76, %v190
    %v192 = vmul.f32 %v77, %v190
    %v193 = vmul.f32 %v78, %v190
    %v194 = vadd.f32 %v186, %v191
    %v195 = vadd.f32 %v187, %v192
    %v196 = vadd.f32 %v188, %v193
    %s197 = sld [smem:[#allocation2 + $0x1f]]
    %v198 = vstv %s197
    %v199 = vmul.f32 %v89, %v198
    %v200 = vmul.f32 %v90, %v198
    %v201 = vmul.f32 %v91, %v198
    %v202 = vadd.f32 %v194, %v199
    %v203 = vadd.f32 %v195, %v200
    %v204 = vadd.f32 %v196, %v201
    %s205 = sld [smem:[#allocation2 + $0x25]]
    %v206 = vstv %s205
    %v207 = vmul.f32 %v102, %v206
    %v208 = vmul.f32 %v103, %v206
    %v209 = vmul.f32 %v104, %v206
    %v210 = vadd.f32 %v202, %v207
    %v211 = vadd.f32 %v203, %v208
    %v212 = vadd.f32 %v204, %v209
    %s213 = sld [smem:[#allocation2 + $0x2b]]
    %v214 = vstv %s213
    %v215 = vmul.f32 %v115, %v214
    %v216 = vmul.f32 %v116, %v214
    %v217 = vmul.f32 %v117, %v214
    %v218 = vadd.f32 %v210, %v215
    %v219 = vadd.f32 %v211, %v216
    %v220 = vadd.f32 %v212, %v217
    %v221 = vmax.f32 %v218, 0.0
    %v222 = vmax.f32 %v219, 0.0
    %v223 = vmax.f32 %v220, 0.0
    %s224 = sld [smem:[#allocation2 + $0xe]]
    %v225 = vstv %s224
    %v226 = vmul.f32 %v50, %v225
    %v227 = vmul.f32 %v51, %v225
    %v228 = vmul.f32 %v52, %v225
    %s229 = sld [smem:[#allocation2 + $0x32]]
    %v230 = vstv %s229
    %v231 = vadd.f32 %v226, %v230
    %v232 = vadd.f32 %v227, %v230
    %v233 = vadd.f32 %v228, %v230
    %s234 = sld [smem:[#allocation2 + $0x14]]
    %v235 = vstv %s234
    %v236 = vmul.f32 %v63, %v235
    %v237 = vmul.f32 %v64, %v235
    %v238 = vmul.f32 %v65, %v235
    %v239 = vadd.f32 %v231, %v236
    %v240 = vadd.f32 %v232, %v237
    %v241 = vadd.f32 %v233, %v238
    %s242 = sld [smem:[#allocation2 + $0x1a]]
    %v243 = vstv %s242
    %v244 = vmul.f32 %v76, %v243
    %v245 = vmul.f32 %v77, %v243
    %v246 = vmul.f32 %v78, %v243
    %v247 = vadd.f32 %v239, %v244
    %v248 = vadd.f32 %v240, %v245
    %v249 = vadd.f32 %v241, %v246
    %s250 = sld [smem:[#allocation2 + $0x20]]
    %v251 = vstv %s250
    %v252 = vmul.f32 %v89, %v251
    %v253 = vmul.f32 %v90, %v251
    %v254 = vmul.f32 %v91, %v251
    %v255 = vadd.f32 %v247, %v252
    %v256 = vadd.f32 %v248, %v253
    %v257 = vadd.f32 %v249, %v254
    %s258 = sld [smem:[#allocation2 + $0x26]]
    %v259 = vstv %s258
    %v260 = vmul.f32 %v102, %v259
    %v261 = vmul.f32 %v103, %v259
    %v262 = vmul.f32 %v104, %v259
    %v263 = vadd.f32 %v255, %v260
    %v264 = vadd.f32 %v256, %v261
    %v265 = vadd.f32 %v257, %v262
    %s266 = sld [smem:[#allocation2 + $0x2c]]
    %v267 = vstv %s266
    %v268 = vmul.f32 %v115, %v267
    %v269 = vmul.f32 %v116, %v267
    %v270 = vmul.f32 %v117, %v267
    %v271 = vadd.f32 %v263, %v268
    %v272 = vadd.f32 %v264, %v269
    %v273 = vadd.f32 %v265, %v270
    %v274 = vmax.f32 %v271, 0.0
    %v275 = vmax.f32 %v272, 0.0
    %v276 = vmax.f32 %v273, 0.0
    %s277 = sld [smem:[#allocation2 + $0xf]]
    %v278 = vstv %s277
    %v279 = vmul.f32 %v50, %v278
    %v280 = vmul.f32 %v51, %v278
    %v281 = vmul.f32 %v52, %v278
    %s282 = sld [smem:[#allocation2 + $0x33]]
    %v283 = vstv %s282
    %v284 = vadd.f32 %v279, %v283
    %v285 = vadd.f32 %v280, %v283
    %v286 = vadd.f32 %v281, %v283
    %s287 = sld [smem:[#allocation2 + $0x15]]
    %v288 = vstv %s287
    %v289 = vmul.f32 %v63, %v288
    %v290 = vmul.f32 %v64, %v288
    %v291 = vmul.f32 %v65, %v288
    %v292 = vadd.f32 %v284, %v289
    %v293 = vadd.f32 %v285, %v290
    %v294 = vadd.f32 %v286, %v291
    %s295 = sld [smem:[#allocation2 + $0x1b]]
    %v296 = vstv %s295
    %v297 = vmul.f32 %v76, %v296
    %v298 = vmul.f32 %v77, %v296
    %v299 = vmul.f32 %v78, %v296
    %v300 = vadd.f32 %v292, %v297
    %v301 = vadd.f32 %v293, %v298
    %v302 = vadd.f32 %v294, %v299
    %s303 = sld [smem:[#allocation2 + $0x21]]
    %v304 = vstv %s303
    %v305 = vmul.f32 %v89, %v304
    %v306 = vmul.f32 %v90, %v304
    %v307 = vmul.f32 %v91, %v304
    %v308 = vadd.f32 %v300, %v305
    %v309 = vadd.f32 %v301, %v306
    %v310 = vadd.f32 %v302, %v307
    %s311 = sld [smem:[#allocation2 + $0x27]]
    %v312 = vstv %s311
    %v313 = vmul.f32 %v102, %v312
    %v314 = vmul.f32 %v103, %v312
    %v315 = vmul.f32 %v104, %v312
    %v316 = vadd.f32 %v308, %v313
    %v317 = vadd.f32 %v309, %v314
    %v318 = vadd.f32 %v310, %v315
    %s319 = sld [smem:[#allocation2 + $0x2d]]
    %v320 = vstv %s319
    %v321 = vmul.f32 %v115, %v320
    %v322 = vmul.f32 %v116, %v320
    %v323 = vmul.f32 %v117, %v320
    %v324 = vadd.f32 %v316, %v321
    %v325 = vadd.f32 %v317, %v322
    %v326 = vadd.f32 %v318, %v323
    %v327 = vmax.f32 %v324, 0.0
    %v328 = vmax.f32 %v325, 0.0
    %v329 = vmax.f32 %v326, 0.0
    %s330 = sld [smem:[#allocation2 + $0x10]]
    %v331 = vstv %s330
    %v332 = vmul.f32 %v50, %v331
    %v333 = vmul.f32 %v51, %v331
    %v334 = vmul.f32 %v52, %v331
    %s335 = sld [smem:[#allocation2 + $0x34]]
    %v336 = vstv %s335
    %v337 = vadd.f32 %v332, %v336
    %v338 = vadd.f32 %v333, %v336
    %v339 = vadd.f32 %v334, %v336
    %s340 = sld [smem:[#allocation2 + $0x16]]
    %v341 = vstv %s340
    %v342 = vmul.f32 %v63, %v341
    %v343 = vmul.f32 %v64, %v341
    %v344 = vmul.f32 %v65, %v341
    %v345 = vadd.f32 %v337, %v342
    %v346 = vadd.f32 %v338, %v343
    %v347 = vadd.f32 %v339, %v344
    %s348 = sld [smem:[#allocation2 + $0x1c]]
    %v349 = vstv %s348
    %v350 = vmul.f32 %v76, %v349
    %v351 = vmul.f32 %v77, %v349
    %v352 = vmul.f32 %v78, %v349
    %v353 = vadd.f32 %v345, %v350
    %v354 = vadd.f32 %v346, %v351
    %v355 = vadd.f32 %v347, %v352
    %s356 = sld [smem:[#allocation2 + $0x22]]
    %v357 = vstv %s356
    %v358 = vmul.f32 %v89, %v357
    %v359 = vmul.f32 %v90, %v357
    %v360 = vmul.f32 %v91, %v357
    %v361 = vadd.f32 %v353, %v358
    %v362 = vadd.f32 %v354, %v359
    %v363 = vadd.f32 %v355, %v360
    %s364 = sld [smem:[#allocation2 + $0x28]]
    %v365 = vstv %s364
    %v366 = vmul.f32 %v102, %v365
    %v367 = vmul.f32 %v103, %v365
    %v368 = vmul.f32 %v104, %v365
    %v369 = vadd.f32 %v361, %v366
    %v370 = vadd.f32 %v362, %v367
    %v371 = vadd.f32 %v363, %v368
    %s372 = sld [smem:[#allocation2 + $0x2e]]
    %v373 = vstv %s372
    %v374 = vmul.f32 %v115, %v373
    %v375 = vmul.f32 %v116, %v373
    %v376 = vmul.f32 %v117, %v373
    %v377 = vadd.f32 %v369, %v374
    %v378 = vadd.f32 %v370, %v375
    %v379 = vadd.f32 %v371, %v376
    %v380 = vmax.f32 %v377, 0.0
    %v381 = vmax.f32 %v378, 0.0
    %v382 = vmax.f32 %v379, 0.0
    %s383 = sld [smem:[#allocation2 + $0x11]]
    %v384 = vstv %s383
    %v385 = vmul.f32 %v50, %v384
    %v386 = vmul.f32 %v51, %v384
    %v387 = vmul.f32 %v52, %v384
    %s388 = sld [smem:[#allocation2 + $0x35]]
    %v389 = vstv %s388
    %v390 = vadd.f32 %v385, %v389
    %v391 = vadd.f32 %v386, %v389
    %v392 = vadd.f32 %v387, %v389
    %s393 = sld [smem:[#allocation2 + $0x17]]
    %v394 = vstv %s393
    %v395 = vmul.f32 %v63, %v394
    %v396 = vmul.f32 %v64, %v394
    %v397 = vmul.f32 %v65, %v394
    %v398 = vadd.f32 %v390, %v395
    %v399 = vadd.f32 %v391, %v396
    %v400 = vadd.f32 %v392, %v397
    %s401 = sld [smem:[#allocation2 + $0x1d]]
    %v402 = vstv %s401
    %v403 = vmul.f32 %v76, %v402
    %v404 = vmul.f32 %v77, %v402
    %v405 = vmul.f32 %v78, %v402
    %v406 = vadd.f32 %v398, %v403
    %v407 = vadd.f32 %v399, %v404
    %v408 = vadd.f32 %v400, %v405
    %s409 = sld [smem:[#allocation2 + $0x23]]
    %v410 = vstv %s409
    %v411 = vmul.f32 %v89, %v410
    %v412 = vmul.f32 %v90, %v410
    %v413 = vmul.f32 %v91, %v410
    %v414 = vadd.f32 %v406, %v411
    %v415 = vadd.f32 %v407, %v412
    %v416 = vadd.f32 %v408, %v413
    %s417 = sld [smem:[#allocation2 + $0x29]]
    %v418 = vstv %s417
    %v419 = vmul.f32 %v102, %v418
    %v420 = vmul.f32 %v103, %v418
    %v421 = vmul.f32 %v104, %v418
    %v422 = vadd.f32 %v414, %v419
    %v423 = vadd.f32 %v415, %v420
    %v424 = vadd.f32 %v416, %v421
    %s425 = sld [smem:[#allocation2 + $0x2f]]
    %v426 = vstv %s425
    %v427 = vmul.f32 %v115, %v426
    %v428 = vmul.f32 %v116, %v426
    %v429 = vmul.f32 %v117, %v426
    %v430 = vadd.f32 %v422, %v427
    %v431 = vadd.f32 %v423, %v428
    %v432 = vadd.f32 %v424, %v429
    %v433 = vmax.f32 %v430, 0.0
    %v434 = vmax.f32 %v431, 0.0
    %v435 = vmax.f32 %v432, 0.0
    %s436 = sld [smem:[#allocation2 + $0x36]]
    %v437 = vstv %s436
    %v438 = vmul.f32 %v168, %v437
    %v439 = vmul.f32 %v169, %v437
    %v440 = vmul.f32 %v170, %v437
    %s441 = sld [smem:[#allocation2 + $0x3c]]
    %v442 = vstv %s441
    %v443 = vadd.f32 %v438, %v442
    %v444 = vadd.f32 %v439, %v442
    %v445 = vadd.f32 %v440, %v442
    %s446 = sld [smem:[#allocation2 + $0x37]]
    %v447 = vstv %s446
    %v448 = vmul.f32 %v221, %v447
    %v449 = vmul.f32 %v222, %v447
    %v450 = vmul.f32 %v223, %v447
    %v451 = vadd.f32 %v443, %v448
    %v452 = vadd.f32 %v444, %v449
    %v453 = vadd.f32 %v445, %v450
    %s454 = sld [smem:[#allocation2 + $0x38]]
    %v455 = vstv %s454
    %v456 = vmul.f32 %v274, %v455
    %v457 = vmul.f32 %v275, %v455
    %v458 = vmul.f32 %v276, %v455
    %v459 = vadd.f32 %v451, %v456
    %v460 = vadd.f32 %v452, %v457
    %v461 = vadd.f32 %v453, %v458
    %s462 = sld [smem:[#allocation2 + $0x39]]
    %v463 = vstv %s462
    %v464 = vmul.f32 %v327, %v463
    %v465 = vmul.f32 %v328, %v463
    %v466 = vmul.f32 %v329, %v463
    %v467 = vadd.f32 %v459, %v464
    %v468 = vadd.f32 %v460, %v465
    %v469 = vadd.f32 %v461, %v466
    %s470 = sld [smem:[#allocation2 + $0x3a]]
    %v471 = vstv %s470
    %v472 = vmul.f32 %v380, %v471
    %v473 = vmul.f32 %v381, %v471
    %v474 = vmul.f32 %v382, %v471
    %v475 = vadd.f32 %v467, %v472
    %v476 = vadd.f32 %v468, %v473
    %v477 = vadd.f32 %v469, %v474
    %s478 = sld [smem:[#allocation2 + $0x3b]]
    %v479 = vstv %s478
    %v480 = vmul.f32 %v433, %v479
    %v481 = vmul.f32 %v434, %v479
    %v482 = vmul.f32 %v435, %v479
    %v483 = vadd.f32 %v475, %v480
    %v484 = vadd.f32 %v476, %v481
    %v485 = vadd.f32 %v477, %v482
    %v486 = vmul.f32 %v483, 1.442695
    %v487 = vpow.pop %v486
    %v488 = vmul.f32 %v484, 1.442695
    %v489 = vpow.pop %v488
    %v490 = vmul.f32 %v485, 1.442695
    %v491 = vpow.pop %v490
    %v492 = vadd.f32 %v487, 1.0
    %v493 = vadd.f32 %v489, 1.0
    %v494 = vadd.f32 %v491, 1.0
    %v495 = vrcp.pop %v492
    %v496 = vmul.f32 1.0, %v495
    %v497 = vrcp.pop %v493
    %v498 = vmul.f32 1.0, %v497
    %v499 = vrcp.pop %v494
    %v500 = vmul.f32 1.0, %v499
    %501 = vst [vmem:[#allocation7] sm:$0xff] %v496
    %502 = vst [vmem:[#allocation7 + $0x8] sm:$0xff] %v498
    %503 = vst [vmem:[#allocation7 + $0x10] sm:$0xff] %v500
    // Predicated region
    $region18: #{tpu_custom_call.1} parent=1 // pred_check
      _
    $region19: #{tpu_custom_call.1} parent=1 // pred_check_branch
      %505 = sbr.rel (0) target = $region21
    $region20: #{tpu_custom_call.1} parent=1 // pred_region
      %s507 = ssub.s32 384, 384
      %508 = vsyncadd [#allocation4], %s507
      %s509 = sshll.u32 [#allocation7], 4
      %s510 = int_to_ptr.vmem [resolvable:$true] %s509
      %515 = dma.vmem_to_hbm [thread:$0]  %s510, 384, %s2, [#allocation4], 128, 128, 8
    $region21: #{tpu_custom_call.1} parent=1 // pred_fallthru
      _
    // Predicated region
    $region22: #{tpu_custom_call.1} parent=1 // pred_check
      _
    $region23: #{tpu_custom_call.1} parent=1 // pred_check_branch
      %517 = sbr.rel (0) target = $region25
    $region24: #{tpu_custom_call.1} parent=1 // pred_region
      %518 = dma.done [#allocation4], 384
    $region25: #{tpu_custom_call.1} parent=1 // pred_fallthru
      _
    %519 = vsyncpa [#allocation3], 1
    %520 = vsyncpa [#allocation4], 1
    %521 = vsyncpa [#allocation5], 1

</llo_original>
